<compile_context>
chip_gen: v7x
topology: tpu7x:2x2x1
jax: 0.10.0
libtpu: 0.0.40
codegen_flags: <defaults>
</compile_context>

<pallas_src>
import math

import numpy as np
import jax
import jax.numpy as jnp
from jax.experimental import pallas as pl
from jax.experimental.pallas import tpu as pltpu


# --------------------- constant precomputation (numpy, trace time) -----------

def _gaussian_window(M, std):
    # scipy.signal.gaussian(M, std): exp(-0.5 * ((n - (M-1)/2) / std)^2)
    n = np.arange(M, dtype=np.float64) - (M - 1) / 2.0
    return np.exp(-0.5 * (n / std) ** 2)


def _gaussian_kernel_freq(h, w, sigma_img):
    """Binary high-pass mask, identical to HighPassLayer._guassian_kernel_freq."""
    def _sigma(size):
        scale_factor = 4
        sigma_freq = 1.0 / (math.pi * sigma_img)
        return sigma_freq * size / scale_factor

    gh = _gaussian_window(h, _sigma(h)).astype(np.float32)
    gw = _gaussian_window(w, _sigma(w)).astype(np.float32)
    g2 = np.outer(gh, gw)
    g2 = np.clip(1.0 - g2, 0.0, 1.0)
    return np.where(g2 > 0.5, 1.0, 0.0).astype(np.float32)


def _highpass_residual_operator(h, w, gkern):
    """K_res = K - I, where filtered_rows = x_rows @ K (rows = flattened images).

    K = Re( F2^T diag(fftshift(gkern).ravel()) conj(F2)^T ) / (H*W) exactly
    realises real(ifft2(fftshift(gkern) * fft2(X))) for real X (images as
    row-major flattened rows).  Computed in float64 -> exact up to final cast.
    """
    m = np.fft.fftshift(gkern.astype(np.float64)).reshape(-1)        # (HW,)
    kh = np.arange(h)
    kw = np.arange(w)
    fh = np.exp(-2j * np.pi * np.outer(kh, kh) / h)
    fw = np.exp(-2j * np.pi * np.outer(kw, kw) / w)
    f2 = np.kron(fh, fw)                      # vec(fft2(X)) = f2 @ vec(X)
    k_full = np.real(f2.T @ (m[:, None] * np.conj(f2).T)) / (h * w)  # (HW, HW)
    return (k_full - np.eye(h * w)).astype(np.float32)


def _pick_block_rows(n, hw):
    """Rows (flattened images) per grid step.

    Multiple of 8 (sublane alignment) dividing n, sized so the double-buffered
    x/out tiles stay well under VMEM on every generation (incl. v7x's 64 MiB),
    preferring >= 2 grid steps so both v7x TensorCores get work.
    """
    bytes_per_row = hw * (4 + 4)                      # f32 in + f32 out
    cap = max(8, (16 << 20) // (2 * bytes_per_row))   # ~16 MiB for streamed tiles
    aligned = [d for d in range(8, min(n, cap) + 1, 8) if n % d == 0]
    if not aligned:
        return n                                      # tiny batch: one full block
    multi = [d for d in aligned if n // d >= 2]
    return max(multi) if multi else max(aligned)


# ----------------------------------- Pallas kernel ---------------------------

def highpass_kernel(x_ref, kres_ref, o_ref):
    # x_ref:    (TB, HW) f32 flattened images (lane-dense: HW is the lane dim)
    # kres_ref: (HW, HW) bf16 fused high-pass residual operator (constant)
    # out = clip(x + x @ K_res, 0, 1)  ==  clip(x @ K, 0, 1)
    x = x_ref[...]
    hp = jnp.dot(x.astype(jnp.bfloat16), kres_ref[...],
                 preferred_element_type=jnp.float32)   # bf16 MXU, f32 accumulate
    o_ref[...] = jnp.clip(x + hp, 0.0, 1.0)


# ----------------------------------- wrapper ---------------------------------

def high_pass_layer(x, sigma=3.0 / math.pi):
    """Equivalent of HighPassLayer.forward. Returns (gkern, filtered_x)."""
    b, c, h, w = x.shape
    n, hw = b * c, h * w

    gk_np = _gaussian_kernel_freq(h, w, sigma)
    gkern = jnp.asarray(gk_np)                                   # returned as-is
    kres = jnp.asarray(_highpass_residual_operator(h, w, gk_np),
                       dtype=jnp.bfloat16)

    xf = x.astype(jnp.float32).reshape(n, hw)                    # lane-dense rows
    tb = _pick_block_rows(n, hw)
    grid = (n // tb,)

    # Streamed x/out tiles double-buffered + operator (constant index_map ->
    # fetched once, but still allocated double-buffered) + slack.
    vmem_need = 2 * (2 * tb * hw * 4) + 2 * (hw * hw * 2)
    vmem_limit = int(max(vmem_need + (2 << 20), 8 << 20))

    out = pl.pallas_call(
        highpass_kernel,
        out_shape=jax.ShapeDtypeStruct((n, hw), jnp.float32),
        grid=grid,
        in_specs=[
            pl.BlockSpec((tb, hw), lambda i: (i, 0)),    # TB flattened images
            pl.BlockSpec((hw, hw), lambda i: (0, 0)),    # constant operator
        ],
        out_specs=pl.BlockSpec((tb, hw), lambda i: (i, 0)),
        compiler_params=pltpu.CompilerParams(
            dimension_semantics=("parallel",),
            vmem_limit_bytes=vmem_limit),
        cost_estimate=pl.CostEstimate(
            flops=2 * n * hw * hw,
            transcendentals=0,
            bytes_accessed=n * hw * 4 + n * hw * 4 + hw * hw * 2),
    )(xf, kres)

    return gkern, out.reshape(b, c, h, w)


# ------------------------------------ main -----------------------------------

if __name__ == "__main__":
    key = jax.random.PRNGKey(0)
    B, C, H, W = 2, 4, 16, 16
    x = jax.random.uniform(key, (B, C, H, W), dtype=jnp.float32)

    gkern, y = high_pass_layer(x)
    jax.block_until_ready((gkern, y))

    # Correctness check against a pure-JAX FFT reference (the exact f32
    # identity path keeps the bf16-matmul error well under tolerance).
    xf = jnp.fft.fft2(x.astype(jnp.complex64))
    xf = jnp.fft.fftshift(gkern) * xf
    ref = jnp.clip(jnp.real(jnp.fft.ifft2(xf)), 0.0, 1.0)
    err = float(jnp.max(jnp.abs(ref - y)))
    assert err < 5e-3, f"max abs error too large: {err}"

    print("KERNEL_OK")
</pallas_src>

<mosaic_0001>
module attributes {stable_mosaic.version = 11 : i64} {
  func.func @highpass_kernel(%arg0: i32, %arg1: memref<8x256xf32, #tpu.memory_space<vmem>>, %arg2: memref<256x256xbf16, #tpu.memory_space<vmem>>, %arg3: memref<8x256xf32, #tpu.memory_space<vmem>>) attributes {dimension_semantics = [#tpu.dimension_semantics<parallel>], iteration_bounds = array<i64: 1>, scalar_prefetch = 0 : i64, scratch_operands = 0 : i64, tpu.core_type = #tpu.core_type<tc>, window_params = [{transform_indices = @transform_0, window_bounds = array<i64: 8, 256>}, {pipeline_mode = #tpu.pipeline_mode<synchronous>, transform_indices = @transform_1, window_bounds = array<i64: 256, 256>}, {transform_indices = @transform_2, window_bounds = array<i64: 8, 256>}]} {
    %c0 = arith.constant 0 : index
    %c0_0 = arith.constant 0 : index
    %0 = vector.load %arg1[%c0, %c0_0] : memref<8x256xf32, #tpu.memory_space<vmem>>, vector<8x256xf32>
    %1 = arith.truncf %0 : vector<8x256xf32> to vector<8x256xbf16>
    %c0_1 = arith.constant 0 : index
    %c0_2 = arith.constant 0 : index
    %2 = vector.load %arg2[%c0_1, %c0_2] : memref<256x256xbf16, #tpu.memory_space<vmem>>, vector<256x256xbf16>
    %cst = arith.constant dense<0.000000e+00> : vector<8x256xf32>
    %3 = tpu.matmul %1, %2, %cst {dimension_numbers = #tpu.dot_dimension_numbers<[1], [0], [0], [1], [0, 0, 1, 1], [], []>} : vector<8x256xbf16>, vector<256x256xbf16>, vector<8x256xf32> -> vector<8x256xf32>
    %4 = arith.addf %0, %3 : vector<8x256xf32>
    %cst_3 = arith.constant 0.000000e+00 : f32
    %cst_4 = arith.constant 1.000000e+00 : f32
    %5 = vector.broadcast %cst_3 : f32 to vector<8x256xf32>
    %6 = arith.maximumf %5, %4 : vector<8x256xf32>
    %7 = vector.broadcast %cst_4 : f32 to vector<8x256xf32>
    %8 = arith.minimumf %7, %6 : vector<8x256xf32>
    %c0_5 = arith.constant 0 : index
    %c0_6 = arith.constant 0 : index
    %9 = vector.load %arg3[%c0_5, %c0_6] : memref<8x256xf32, #tpu.memory_space<vmem>>, vector<8x256xf32>
    tpu.vector_store %arg3[%c0_5, %c0_6], %8 {strides = array<i32>} : memref<8x256xf32, #tpu.memory_space<vmem>>, vector<8x256xf32>,
    return
  }
  func.func @transform_0(%arg0: i32) -> (i32, i32) {
    %c0_i32 = arith.constant 0 : i32
    %c0_i32_0 = arith.constant 0 : i32
    return %arg0, %c0_i32 : i32, i32
  }
  func.func @transform_1(%arg0: i32) -> (i32, i32) {
    %c0_i32 = arith.constant 0 : i32
    %c0_i32_0 = arith.constant 0 : i32
    %c0_i32_1 = arith.constant 0 : i32
    return %c0_i32, %c0_i32_0 : i32, i32
  }
  func.func @transform_2(%arg0: i32) -> (i32, i32) {
    %c0_i32 = arith.constant 0 : i32
    %c0_i32_0 = arith.constant 0 : i32
    return %arg0, %c0_i32 : i32, i32
  }
}

</mosaic_0001>

<llo_original>
// kernel: tpu_custom_call.1
$region0: #{tpu_custom_call.1}
  #allocation0 [shape = 'u32[]', space=smem, size = 0x4, offset = 0x4, fixed_abs, tag = 'smem constant byte address 0x4 - core index']
  #allocation1 [shape = 'u32[144,128]{1,0:T(1,128)}', space=vmem, size = 0x12000, scoped, tag = 'internal scratch']
  %s0 = inlined_call_operand.hbm [shape: f32[8,256], index: 0, kind: input, shape index: {}]
  %s1 = inlined_call_operand.hbm [shape: bf16[256,256], index: 1, kind: input, shape index: {}]
  %s2 = inlined_call_operand.hbm [shape: f32[8,256], index: 2, kind: output, shape index: {}]
  %s3 = sld [smem:[#allocation0]]
  $region26: #{tpu_custom_call.1} parent=0
    _
  %s5 = ssub.s32 1, %s3
  %s6 = scalar_select 0, %s5, %s3
  $region1: #{tpu_custom_call.1} parent=0
    #allocation2 [shape = 'u8[8192]{0}', space=vmem, size = 0x2000, scoped, tag = 'input window, operand 0, single buffered']
    #allocation3 [shape = 's32[1]{0}', space=sflag, size = 0x4, scoped, tag = 'scoped memory for tpu_custom_call.1']
    #allocation4 [shape = 's32[1]{0}', space=sflag, size = 0x4, scoped, tag = 'scoped memory for tpu_custom_call.1']
    #allocation5 [shape = 'u8[131072]{0}', space=vmem, size = 0x20000, scoped, tag = 'input window, operand 1, single buffered']
    #allocation6 [shape = 's32[1]{0}', space=sflag, size = 0x4, scoped, tag = 'scoped memory for tpu_custom_call.1']
    #allocation7 [shape = 'u8[8192]{0}', space=vmem, size = 0x2000, scoped, tag = 'output window, operand 0, single buffered']
    %7 = vsyncpa [#allocation3], 0
    %8 = vsyncpa [#allocation6], 0
    %9 = vsyncpa [#allocation4], 0
    // Predicated region
    $region2: #{tpu_custom_call.1} parent=1 // pred_check
      _
    $region3: #{tpu_custom_call.1} parent=1 // pred_check_branch
      %11 = sbr.rel (0) target = $region5
    $region4: #{tpu_custom_call.1} parent=1 // pred_region
      %s13 = ssub.s32 256, 256
      %14 = vsyncadd [#allocation3], %s13
      %s16 = sshll.u32 [#allocation2], 4
      %s17 = int_to_ptr.vmem [resolvable:$true] %s16
      %19 = dma.hbm_to_vmem [thread:$0]  %s0, 256, %s17, [#allocation3]
    $region5: #{tpu_custom_call.1} parent=1 // pred_fallthru
      _
    // Predicated region
    $region6: #{tpu_custom_call.1} parent=1 // pred_check
      _
    $region7: #{tpu_custom_call.1} parent=1 // pred_check_branch
      %21 = sbr.rel (0) target = $region9
    $region8: #{tpu_custom_call.1} parent=1 // pred_region
      %s23 = ssub.s32 4096, 4096
      %24 = vsyncadd [#allocation6], %s23
      %s25 = sshll.u32 [#allocation5], 4
      %s26 = int_to_ptr.vmem [resolvable:$true] %s25
      %31 = dma.hbm_to_vmem [thread:$0]  %s1, 4096, %s26, [#allocation6], 128, 128, 8
    $region9: #{tpu_custom_call.1} parent=1 // pred_fallthru
      _
    // Predicated region
    $region10: #{tpu_custom_call.1} parent=1 // pred_check
      _
    $region11: #{tpu_custom_call.1} parent=1 // pred_check_branch
      %33 = sbr.rel (0) target = $region13
    $region12: #{tpu_custom_call.1} parent=1 // pred_region
      %34 = dma.done [#allocation3], 256
    $region13: #{tpu_custom_call.1} parent=1 // pred_fallthru
      _
    // Predicated region
    $region14: #{tpu_custom_call.1} parent=1 // pred_check
      _
    $region15: #{tpu_custom_call.1} parent=1 // pred_check_branch
      %36 = sbr.rel (0) target = $region17
    $region16: #{tpu_custom_call.1} parent=1 // pred_region
      %37 = dma.done [#allocation6], 4096
    $region17: #{tpu_custom_call.1} parent=1 // pred_fallthru
      _
    %v38 = vld [vmem:[#allocation2] sm:$0xff]
    %v39 = vld [vmem:[#allocation2 + $0x8] sm:$0xff]
    %v40 = vpack.c.bf16 %v38, %v38
    %v41 = vpack.c.bf16 %v39, %v39
    %v42 = vld [vmem:[#allocation5] sm:$0xff]
    %v43 = vld [vmem:[#allocation5 + $0x8] sm:$0xff]
    %v44 = vld [vmem:[#allocation5 + $0x10] sm:$0xff]
    %v45 = vld [vmem:[#allocation5 + $0x18] sm:$0xff]
    %v46 = vld [vmem:[#allocation5 + $0x20] sm:$0xff]
    %v47 = vld [vmem:[#allocation5 + $0x28] sm:$0xff]
    %v48 = vld [vmem:[#allocation5 + $0x30] sm:$0xff]
    %v49 = vld [vmem:[#allocation5 + $0x38] sm:$0xff]
    %v50 = vld [vmem:[#allocation5 + $0x40] sm:$0xff]
    %v51 = vld [vmem:[#allocation5 + $0x48] sm:$0xff]
    %v52 = vld [vmem:[#allocation5 + $0x50] sm:$0xff]
    %v53 = vld [vmem:[#allocation5 + $0x58] sm:$0xff]
    %v54 = vld [vmem:[#allocation5 + $0x60] sm:$0xff]
    %v55 = vld [vmem:[#allocation5 + $0x68] sm:$0xff]
    %v56 = vld [vmem:[#allocation5 + $0x70] sm:$0xff]
    %v57 = vld [vmem:[#allocation5 + $0x78] sm:$0xff]
    %v58 = vld [vmem:[#allocation5 + $0x80] sm:$0xff]
    %v59 = vld [vmem:[#allocation5 + $0x88] sm:$0xff]
    %v60 = vld [vmem:[#allocation5 + $0x90] sm:$0xff]
    %v61 = vld [vmem:[#allocation5 + $0x98] sm:$0xff]
    %v62 = vld [vmem:[#allocation5 + $0xa0] sm:$0xff]
    %v63 = vld [vmem:[#allocation5 + $0xa8] sm:$0xff]
    %v64 = vld [vmem:[#allocation5 + $0xb0] sm:$0xff]
    %v65 = vld [vmem:[#allocation5 + $0xb8] sm:$0xff]
    %v66 = vld [vmem:[#allocation5 + $0xc0] sm:$0xff]
    %v67 = vld [vmem:[#allocation5 + $0xc8] sm:$0xff]
    %v68 = vld [vmem:[#allocation5 + $0xd0] sm:$0xff]
    %v69 = vld [vmem:[#allocation5 + $0xd8] sm:$0xff]
    %v70 = vld [vmem:[#allocation5 + $0xe0] sm:$0xff]
    %v71 = vld [vmem:[#allocation5 + $0xe8] sm:$0xff]
    %v72 = vld [vmem:[#allocation5 + $0xf0] sm:$0xff]
    %v73 = vld [vmem:[#allocation5 + $0xf8] sm:$0xff]
    %v106 = vunpack.c.l.b16 %v42
    %v107 = vunpack.c.h.b16 %v42
    %v108 = vunpack.c.l.b16 %v43
    %v109 = vunpack.c.h.b16 %v43
    %v110 = vunpack.c.l.b16 %v44
    %v111 = vunpack.c.h.b16 %v44
    %v112 = vunpack.c.l.b16 %v45
    %v113 = vunpack.c.h.b16 %v45
    %v114 = vunpack.c.l.b16 %v46
    %v115 = vunpack.c.h.b16 %v46
    %v116 = vunpack.c.l.b16 %v47
    %v117 = vunpack.c.h.b16 %v47
    %v118 = vunpack.c.l.b16 %v48
    %v119 = vunpack.c.h.b16 %v48
    %v120 = vunpack.c.l.b16 %v49
    %v121 = vunpack.c.h.b16 %v49
    %v122 = vunpack.c.l.b16 %v50
    %v123 = vunpack.c.h.b16 %v50
    %v124 = vunpack.c.l.b16 %v51
    %v125 = vunpack.c.h.b16 %v51
    %v126 = vunpack.c.l.b16 %v52
    %v127 = vunpack.c.h.b16 %v52
    %v128 = vunpack.c.l.b16 %v53
    %v129 = vunpack.c.h.b16 %v53
    %v130 = vunpack.c.l.b16 %v54
    %v131 = vunpack.c.h.b16 %v54
    %v132 = vunpack.c.l.b16 %v55
    %v133 = vunpack.c.h.b16 %v55
    %v134 = vunpack.c.l.b16 %v56
    %v135 = vunpack.c.h.b16 %v56
    %v136 = vunpack.c.l.b16 %v57
    %v137 = vunpack.c.h.b16 %v57
    %v138 = vunpack.c.l.b16 %v58
    %v139 = vunpack.c.h.b16 %v58
    %v140 = vunpack.c.l.b16 %v59
    %v141 = vunpack.c.h.b16 %v59
    %v142 = vunpack.c.l.b16 %v60
    %v143 = vunpack.c.h.b16 %v60
    %v144 = vunpack.c.l.b16 %v61
    %v145 = vunpack.c.h.b16 %v61
    %v146 = vunpack.c.l.b16 %v62
    %v147 = vunpack.c.h.b16 %v62
    %v148 = vunpack.c.l.b16 %v63
    %v149 = vunpack.c.h.b16 %v63
    %v150 = vunpack.c.l.b16 %v64
    %v151 = vunpack.c.h.b16 %v64
    %v152 = vunpack.c.l.b16 %v65
    %v153 = vunpack.c.h.b16 %v65
    %v154 = vunpack.c.l.b16 %v66
    %v155 = vunpack.c.h.b16 %v66
    %v156 = vunpack.c.l.b16 %v67
    %v157 = vunpack.c.h.b16 %v67
    %v158 = vunpack.c.l.b16 %v68
    %v159 = vunpack.c.h.b16 %v68
    %v160 = vunpack.c.l.b16 %v69
    %v161 = vunpack.c.h.b16 %v69
    %v162 = vunpack.c.l.b16 %v70
    %v163 = vunpack.c.h.b16 %v70
    %v164 = vunpack.c.l.b16 %v71
    %v165 = vunpack.c.h.b16 %v71
    %v166 = vunpack.c.l.b16 %v72
    %v167 = vunpack.c.h.b16 %v72
    %v168 = vunpack.c.l.b16 %v73
    %v169 = vunpack.c.h.b16 %v73
    %v170 = vpack.c.b16 %v108, %v106
    %v171 = vpack.c.b16 %v109, %v107
    %v172 = vpack.c.b16 %v112, %v110
    %v173 = vpack.c.b16 %v113, %v111
    %v174 = vpack.c.b16 %v116, %v114
    %v175 = vpack.c.b16 %v117, %v115
    %v176 = vpack.c.b16 %v120, %v118
    %v177 = vpack.c.b16 %v121, %v119
    %v178 = vpack.c.b16 %v124, %v122
    %v179 = vpack.c.b16 %v125, %v123
    %v180 = vpack.c.b16 %v128, %v126
    %v181 = vpack.c.b16 %v129, %v127
    %v182 = vpack.c.b16 %v132, %v130
    %v183 = vpack.c.b16 %v133, %v131
    %v184 = vpack.c.b16 %v136, %v134
    %v185 = vpack.c.b16 %v137, %v135
    %v186 = vpack.c.b16 %v140, %v138
    %v187 = vpack.c.b16 %v141, %v139
    %v188 = vpack.c.b16 %v144, %v142
    %v189 = vpack.c.b16 %v145, %v143
    %v190 = vpack.c.b16 %v148, %v146
    %v191 = vpack.c.b16 %v149, %v147
    %v192 = vpack.c.b16 %v152, %v150
    %v193 = vpack.c.b16 %v153, %v151
    %v194 = vpack.c.b16 %v156, %v154
    %v195 = vpack.c.b16 %v157, %v155
    %v196 = vpack.c.b16 %v160, %v158
    %v197 = vpack.c.b16 %v161, %v159
    %v198 = vpack.c.b16 %v164, %v162
    %v199 = vpack.c.b16 %v165, %v163
    %v200 = vpack.c.b16 %v168, %v166
    %v201 = vpack.c.b16 %v169, %v167
    %234 = vmatprep.subr.bf16.mxu0 %v171
    %235 = vmatpush1.bf16.msra.mxu0 %v170
    %236 = vmatprep.subr.bf16.mxu0 %v173
    %237 = vmatpush1.bf16.msra.mxu0 %v172
    %238 = vmatprep.subr.bf16.mxu0 %v175
    %239 = vmatpush1.bf16.msra.mxu0 %v174
    %240 = vmatprep.subr.bf16.mxu0 %v177
    %241 = vmatpush1.bf16.msra.mxu0 %v176
    %242 = vmatprep.subr.bf16.mxu0 %v179
    %243 = vmatpush1.bf16.msra.mxu0 %v178
    %244 = vmatprep.subr.bf16.mxu0 %v181
    %245 = vmatpush1.bf16.msra.mxu0 %v180
    %246 = vmatprep.subr.bf16.mxu0 %v183
    %247 = vmatpush1.bf16.msra.mxu0 %v182
    %248 = vmatprep.subr.bf16.mxu0 %v185
    %249 = vmatpush1.bf16.msra.mxu0 %v184
    %250 = vmatprep.subr.bf16.mxu0 %v187
    %251 = vmatpush1.bf16.msra.mxu0 %v186
    %252 = vmatprep.subr.bf16.mxu0 %v189
    %253 = vmatpush1.bf16.msra.mxu0 %v188
    %254 = vmatprep.subr.bf16.mxu0 %v191
    %255 = vmatpush1.bf16.msra.mxu0 %v190
    %256 = vmatprep.subr.bf16.mxu0 %v193
    %257 = vmatpush1.bf16.msra.mxu0 %v192
    %258 = vmatprep.subr.bf16.mxu0 %v195
    %259 = vmatpush1.bf16.msra.mxu0 %v194
    %260 = vmatprep.subr.bf16.mxu0 %v197
    %261 = vmatpush1.bf16.msra.mxu0 %v196
    %262 = vmatprep.subr.bf16.mxu0 %v199
    %263 = vmatpush1.bf16.msra.mxu0 %v198
    %264 = vmatprep.subr.bf16.mxu0 %v201
    %265 = vmatpush1.bf16.msra.mxu0 %v200
    %266 = vmatprep.mubr.bf16.mxu0 %v41
    %267 = vmatmul.mubr.bf16.gmra.mrb[0].mxu0 %v40
    %v268 = vpop.f32.mrb[0].mxu0
    %v269 = vadd.f32 0.0, %v268
    %v270 = vpop.f32.mrb[0].mxu0
    %v271 = vadd.f32 0.0, %v270
    %v272 = vpop.f32.mrb[0].mxu0
    %v273 = vpop.f32.mrb[0].mxu0
    %274 = vdwg.mxu0
    %v275 = vadd.f32 %v38, %v269
    %v276 = vadd.f32 %v39, %v271
    %v277 = vmax.f32 %v275, 0.0
    %v278 = vmax.f32 %v276, 0.0
    %v279 = vmin.f32 %v277, 1.0
    %v280 = vmin.f32 %v278, 1.0
    %281 = vst [vmem:[#allocation7] sm:$0xff] %v279
    %282 = vst [vmem:[#allocation7 + $0x8] sm:$0xff] %v280
    // Predicated region
    $region18: #{tpu_custom_call.1} parent=1 // pred_check
      _
    $region19: #{tpu_custom_call.1} parent=1 // pred_check_branch
      %284 = sbr.rel (0) target = $region21
    $region20: #{tpu_custom_call.1} parent=1 // pred_region
      %s286 = ssub.s32 256, 256
      %287 = vsyncadd [#allocation4], %s286
      %s289 = sshll.u32 [#allocation7], 4
      %s290 = int_to_ptr.vmem [resolvable:$true] %s289
      %292 = dma.vmem_to_hbm [thread:$0]  %s290, 256, %s2, [#allocation4]
    $region21: #{tpu_custom_call.1} parent=1 // pred_fallthru
      _
    // Predicated region
    $region22: #{tpu_custom_call.1} parent=1 // pred_check
      _
    $region23: #{tpu_custom_call.1} parent=1 // pred_check_branch
      %294 = sbr.rel (0) target = $region25
    $region24: #{tpu_custom_call.1} parent=1 // pred_region
      %295 = dma.done [#allocation4], 256
    $region25: #{tpu_custom_call.1} parent=1 // pred_fallthru
      _
    %296 = vsyncpa [#allocation3], 1
    %297 = vsyncpa [#allocation6], 1
    %298 = vsyncpa [#allocation4], 1

</llo_original>
